<compile_context>
chip_gen: v6e
topology: v6e:2x2x1
jax: 0.10.0
libtpu: 0.0.40
codegen_flags: <defaults>
</compile_context>

<pallas_src>
import jax
import jax.numpy as jnp
from jax.experimental import pallas as pl
from jax.experimental.pallas import tpu as pltpu


def _bm_kernel(x_ref, o_ref):
    """x_ref: (tn, H, W) f32 block in VMEM ; o_ref: (tn, 1) f32 per-image blur."""
    x = x_ref[...]
    tn, H, W = x.shape
    inv9 = jnp.float32(1.0 / 9.0)

    # ---------------- vertical direction ----------------
    # forward diff on interior rows i = 1..H-3 (sublane-offset slices)
    d_f_v = jnp.abs(x[:, 1:H - 2, :] - x[:, 2:H - 1, :])             # (tn, H-3, W)
    # telescoped blur diff: D_B_ver[i] = |x[i-4]*[i>=4] - x[i+5]*[i<=H-6]| / 9,
    # split at the zero-pad boundaries (rows outside the image are zero):
    db_vL = jnp.abs(x[:, 6:9, :]) * inv9                             # i = 1..3
    db_vM = jnp.abs(x[:, 0:H - 9, :] - x[:, 9:H, :]) * inv9          # i = 4..H-6
    db_vR = jnp.abs(x[:, H - 9:H - 6, :]) * inv9                     # i = H-5..H-3
    v_part = (jnp.maximum(d_f_v[:, 0:3, :] - db_vL, 0.0).sum(axis=1) +
              jnp.maximum(d_f_v[:, 3:H - 6, :] - db_vM, 0.0).sum(axis=1) +
              jnp.maximum(d_f_v[:, H - 6:H - 3, :] - db_vR, 0.0).sum(axis=1))
    # interior column crop w = 1..W-2, then cross-lane reduce
    s_ver = jnp.sum(v_part[:, 1:W - 1], axis=1, keepdims=True)       # (tn, 1)

    # ---------------- horizontal direction ----------------
    xr = x[:, 1:H - 1, :]                                            # rows h = 1..H-2
    d_f_h = jnp.abs(xr[:, :, 1:W - 2] - xr[:, :, 2:W - 1])           # cols j = 1..W-3
    db_hL = jnp.abs(xr[:, :, 6:9]) * inv9                            # j = 1..3
    db_hM = jnp.abs(xr[:, :, 0:W - 9] - xr[:, :, 9:W]) * inv9        # j = 4..W-6
    db_hR = jnp.abs(xr[:, :, W - 9:W - 6]) * inv9                    # j = W-5..W-3
    h_part = (jnp.maximum(d_f_h[:, :, 0:3] - db_hL, 0.0).sum(axis=2) +
              jnp.maximum(d_f_h[:, :, 3:W - 6] - db_hM, 0.0).sum(axis=2) +
              jnp.maximum(d_f_h[:, :, W - 6:W - 3] - db_hR, 0.0).sum(axis=2))
    s_hor = jnp.sum(h_part, axis=1, keepdims=True)                   # (tn, 1)

    o_ref[...] = jnp.maximum(s_ver, s_hor)


_LIVE_SLABS = 8   # ~double-buffered input block + elementwise intermediates


def _vmem_budget_and_limit():
    """(tile_budget_bytes, vmem_limit_bytes) sized per TPU generation."""
    try:
        cap = int(pltpu.get_tpu_info().vmem_capacity_bytes)
    except Exception:
        cap = 64 * 1024 * 1024                 # conservative default (v7x-sized VMEM)
    if cap <= 80 * 1024 * 1024:                # v7x-class: 64 MiB per TensorCore
        return 30 * 1024 * 1024, 48 * 1024 * 1024
    return 60 * 1024 * 1024, 96 * 1024 * 1024  # v5e / v6e: 128 MiB VMEM


def _pick_tile_n(N, H, W, tile_budget_bytes):
    """Images per grid step; multiple of 8 so the (tn, 1) output block tiles legally."""
    bytes_per_image = H * W * 4 * _LIVE_SLABS
    cap = max(8, (tile_budget_bytes // max(bytes_per_image, 1)) // 8 * 8)
    # Keep >=2 grid steps whenever N allows it (lights up both v7x TensorCores).
    if N >= 16:
        cap = min(cap, max(8, (-(-N // 2) + 7) // 8 * 8))
    # TODO(synk): images so large that even tn=8 exceeds the VMEM budget would
    # need an H-streaming variant (halo'd row chunks); not implemented here.
    return min(cap, (N + 7) // 8 * 8)


def _bm_reference(x):
    """Pure-JAX reference (mirrors the PyTorch module); also the tiny-shape fallback."""
    B, C, H, W = x.shape
    xp_h = jnp.pad(x, ((0, 0), (0, 0), (0, 0), (4, 4)))
    xp_v = jnp.pad(x, ((0, 0), (0, 0), (4, 4), (0, 0)))
    b_hor = sum(xp_h[:, :, :, k:k + W] for k in range(9)) / 9.0
    b_ver = sum(xp_v[:, :, k:k + H, :] for k in range(9)) / 9.0
    d_f_ver = jnp.abs(x[:, :, :-1, :] - x[:, :, 1:, :])
    d_f_hor = jnp.abs(x[:, :, :, :-1] - x[:, :, :, 1:])
    d_b_ver = jnp.abs(b_ver[:, :, :-1, :] - b_ver[:, :, 1:, :])
    d_b_hor = jnp.abs(b_hor[:, :, :, :-1] - b_hor[:, :, :, 1:])
    v_ver = jnp.maximum(d_f_ver - d_b_ver, 0.0)
    v_hor = jnp.maximum(d_f_hor - d_b_hor, 0.0)
    s_ver = jnp.sum(v_ver[:, :, 1:-1, 1:-1], axis=(-2, -1))
    s_hor = jnp.sum(v_hor[:, :, 1:-1, 1:-1], axis=(-2, -1))
    return jnp.maximum(s_ver, s_hor)


@jax.jit
def bm_forward(x):
    """x: (B, C, H, W) float -> blur: (B, C) float32 (matches BM.forward)."""
    B, C, H, W = x.shape
    x = x.astype(jnp.float32)
    if H < 10 or W < 10:
        # TODO(synk): degenerate tiny spatial dims use the plain-JAX path (the
        # boundary-split Pallas kernel assumes H, W >= 10).
        return _bm_reference(x)

    N = B * C
    xr = x.reshape(N, H, W)                     # metadata-only; no extra HBM pass

    tile_budget, vmem_limit = _vmem_budget_and_limit()
    tn = _pick_tile_n(N, H, W, tile_budget)
    n_pad = pl.cdiv(N, tn) * tn
    if n_pad != N:                              # only if N % tn != 0 (padded images -> blur 0, dropped)
        xr = jnp.pad(xr, ((0, n_pad - N), (0, 0), (0, 0)))

    blur = pl.pallas_call(
        _bm_kernel,
        out_shape=jax.ShapeDtypeStruct((n_pad, 1), jnp.float32),
        grid=(n_pad // tn,),
        in_specs=[pl.BlockSpec((tn, H, W), lambda i: (i, 0, 0))],
        out_specs=pl.BlockSpec((tn, 1), lambda i: (i, 0)),
        compiler_params=pltpu.CompilerParams(
            dimension_semantics=("parallel",),
            vmem_limit_bytes=vmem_limit),
    )(xr)
    return blur[:N, 0].reshape(B, C)


if __name__ == "__main__":
    key = jax.random.PRNGKey(0)
    B, C, H, W = 2, 4, 16, 16
    x = jax.random.normal(key, (B, C, H, W), dtype=jnp.float32)

    out = bm_forward(x)
    out = jax.block_until_ready(out)

    ref = _bm_reference(x)
    assert out.shape == (B, C), out.shape
    assert jnp.allclose(out, ref, atol=1e-4, rtol=1e-4)
    print("KERNEL_OK")
</pallas_src>

<mosaic_0001>
module attributes {stable_mosaic.version = 11 : i64} {
  func.func @_bm_kernel(%arg0: i32, %arg1: memref<8x16x16xf32, #tpu.memory_space<vmem>>, %arg2: memref<8x1xf32, #tpu.memory_space<vmem>>) attributes {dimension_semantics = [#tpu.dimension_semantics<parallel>], iteration_bounds = array<i64: 1>, scalar_prefetch = 0 : i64, scratch_operands = 0 : i64, tpu.core_type = #tpu.core_type<tc>, window_params = [{transform_indices = @transform_0, window_bounds = array<i64: 8, 16, 16>}, {transform_indices = @transform_1, window_bounds = array<i64: 8, 1>}]} {
    %c0 = arith.constant 0 : index
    %c0_0 = arith.constant 0 : index
    %c0_1 = arith.constant 0 : index
    %0 = vector.load %arg1[%c0, %c0_0, %c0_1] : memref<8x16x16xf32, #tpu.memory_space<vmem>>, vector<8x16x16xf32>
    %1 = vector.extract_strided_slice %0 {offsets = [0, 1, 0], sizes = [8, 13, 16], strides = [1, 1, 1]} : vector<8x16x16xf32> to vector<8x13x16xf32>
    %2 = vector.extract_strided_slice %0 {offsets = [0, 2, 0], sizes = [8, 13, 16], strides = [1, 1, 1]} : vector<8x16x16xf32> to vector<8x13x16xf32>
    %3 = arith.subf %1, %2 : vector<8x13x16xf32>
    %4 = math.absf %3 : vector<8x13x16xf32>
    %5 = vector.extract_strided_slice %0 {offsets = [0, 6, 0], sizes = [8, 3, 16], strides = [1, 1, 1]} : vector<8x16x16xf32> to vector<8x3x16xf32>
    %6 = math.absf %5 : vector<8x3x16xf32>
    %cst = arith.constant 0.111111112 : f32
    %7 = vector.broadcast %cst : f32 to vector<8x3x16xf32>
    %8 = arith.mulf %6, %7 : vector<8x3x16xf32>
    %9 = vector.extract_strided_slice %0 {offsets = [0, 0, 0], sizes = [8, 7, 16], strides = [1, 1, 1]} : vector<8x16x16xf32> to vector<8x7x16xf32>
    %10 = vector.extract_strided_slice %0 {offsets = [0, 9, 0], sizes = [8, 7, 16], strides = [1, 1, 1]} : vector<8x16x16xf32> to vector<8x7x16xf32>
    %11 = arith.subf %9, %10 : vector<8x7x16xf32>
    %12 = math.absf %11 : vector<8x7x16xf32>
    %cst_2 = arith.constant 0.111111112 : f32
    %13 = vector.broadcast %cst_2 : f32 to vector<8x7x16xf32>
    %14 = arith.mulf %12, %13 : vector<8x7x16xf32>
    %15 = vector.extract_strided_slice %0 {offsets = [0, 7, 0], sizes = [8, 3, 16], strides = [1, 1, 1]} : vector<8x16x16xf32> to vector<8x3x16xf32>
    %16 = math.absf %15 : vector<8x3x16xf32>
    %cst_3 = arith.constant 0.111111112 : f32
    %17 = vector.broadcast %cst_3 : f32 to vector<8x3x16xf32>
    %18 = arith.mulf %16, %17 : vector<8x3x16xf32>
    %19 = vector.extract_strided_slice %4 {offsets = [0, 0, 0], sizes = [8, 3, 16], strides = [1, 1, 1]} : vector<8x13x16xf32> to vector<8x3x16xf32>
    %20 = arith.subf %19, %8 : vector<8x3x16xf32>
    %cst_4 = arith.constant 0.000000e+00 : f32
    %21 = vector.broadcast %cst_4 : f32 to vector<8x3x16xf32>
    %22 = arith.maximumf %20, %21 : vector<8x3x16xf32>
    %cst_5 = arith.constant dense<0.000000e+00> : vector<8x16xf32>
    %23 = vector.multi_reduction <add>, %22, %cst_5 [1] : vector<8x3x16xf32> to vector<8x16xf32>
    %24 = vector.extract_strided_slice %4 {offsets = [0, 3, 0], sizes = [8, 7, 16], strides = [1, 1, 1]} : vector<8x13x16xf32> to vector<8x7x16xf32>
    %25 = arith.subf %24, %14 : vector<8x7x16xf32>
    %cst_6 = arith.constant 0.000000e+00 : f32
    %26 = vector.broadcast %cst_6 : f32 to vector<8x7x16xf32>
    %27 = arith.maximumf %25, %26 : vector<8x7x16xf32>
    %cst_7 = arith.constant dense<0.000000e+00> : vector<8x16xf32>
    %28 = vector.multi_reduction <add>, %27, %cst_7 [1] : vector<8x7x16xf32> to vector<8x16xf32>
    %29 = arith.addf %23, %28 : vector<8x16xf32>
    %30 = vector.extract_strided_slice %4 {offsets = [0, 10, 0], sizes = [8, 3, 16], strides = [1, 1, 1]} : vector<8x13x16xf32> to vector<8x3x16xf32>
    %31 = arith.subf %30, %18 : vector<8x3x16xf32>
    %cst_8 = arith.constant 0.000000e+00 : f32
    %32 = vector.broadcast %cst_8 : f32 to vector<8x3x16xf32>
    %33 = arith.maximumf %31, %32 : vector<8x3x16xf32>
    %cst_9 = arith.constant dense<0.000000e+00> : vector<8x16xf32>
    %34 = vector.multi_reduction <add>, %33, %cst_9 [1] : vector<8x3x16xf32> to vector<8x16xf32>
    %35 = arith.addf %29, %34 : vector<8x16xf32>
    %36 = vector.extract_strided_slice %35 {offsets = [0, 1], sizes = [8, 14], strides = [1, 1]} : vector<8x16xf32> to vector<8x14xf32>
    %cst_10 = arith.constant dense<0.000000e+00> : vector<8xf32>
    %37 = vector.multi_reduction <add>, %36, %cst_10 [1] : vector<8x14xf32> to vector<8xf32>
    %38 = vector.shape_cast %37 : vector<8xf32> to vector<8x1xf32>
    %39 = vector.extract_strided_slice %0 {offsets = [0, 1, 0], sizes = [8, 14, 16], strides = [1, 1, 1]} : vector<8x16x16xf32> to vector<8x14x16xf32>
    %40 = vector.extract_strided_slice %39 {offsets = [0, 0, 1], sizes = [8, 14, 13], strides = [1, 1, 1]} : vector<8x14x16xf32> to vector<8x14x13xf32>
    %41 = vector.extract_strided_slice %39 {offsets = [0, 0, 2], sizes = [8, 14, 13], strides = [1, 1, 1]} : vector<8x14x16xf32> to vector<8x14x13xf32>
    %42 = arith.subf %40, %41 : vector<8x14x13xf32>
    %43 = math.absf %42 : vector<8x14x13xf32>
    %44 = vector.extract_strided_slice %39 {offsets = [0, 0, 6], sizes = [8, 14, 3], strides = [1, 1, 1]} : vector<8x14x16xf32> to vector<8x14x3xf32>
    %45 = math.absf %44 : vector<8x14x3xf32>
    %cst_11 = arith.constant 0.111111112 : f32
    %46 = vector.broadcast %cst_11 : f32 to vector<8x14x3xf32>
    %47 = arith.mulf %45, %46 : vector<8x14x3xf32>
    %48 = vector.extract_strided_slice %39 {offsets = [0, 0, 0], sizes = [8, 14, 7], strides = [1, 1, 1]} : vector<8x14x16xf32> to vector<8x14x7xf32>
    %49 = vector.extract_strided_slice %39 {offsets = [0, 0, 9], sizes = [8, 14, 7], strides = [1, 1, 1]} : vector<8x14x16xf32> to vector<8x14x7xf32>
    %50 = arith.subf %48, %49 : vector<8x14x7xf32>
    %51 = math.absf %50 : vector<8x14x7xf32>
    %cst_12 = arith.constant 0.111111112 : f32
    %52 = vector.broadcast %cst_12 : f32 to vector<8x14x7xf32>
    %53 = arith.mulf %51, %52 : vector<8x14x7xf32>
    %54 = vector.extract_strided_slice %39 {offsets = [0, 0, 7], sizes = [8, 14, 3], strides = [1, 1, 1]} : vector<8x14x16xf32> to vector<8x14x3xf32>
    %55 = math.absf %54 : vector<8x14x3xf32>
    %cst_13 = arith.constant 0.111111112 : f32
    %56 = vector.broadcast %cst_13 : f32 to vector<8x14x3xf32>
    %57 = arith.mulf %55, %56 : vector<8x14x3xf32>
    %58 = vector.extract_strided_slice %43 {offsets = [0, 0, 0], sizes = [8, 14, 3], strides = [1, 1, 1]} : vector<8x14x13xf32> to vector<8x14x3xf32>
    %59 = arith.subf %58, %47 : vector<8x14x3xf32>
    %cst_14 = arith.constant 0.000000e+00 : f32
    %60 = vector.broadcast %cst_14 : f32 to vector<8x14x3xf32>
    %61 = arith.maximumf %59, %60 : vector<8x14x3xf32>
    %cst_15 = arith.constant dense<0.000000e+00> : vector<8x14xf32>
    %62 = vector.multi_reduction <add>, %61, %cst_15 [2] : vector<8x14x3xf32> to vector<8x14xf32>
    %63 = vector.extract_strided_slice %43 {offsets = [0, 0, 3], sizes = [8, 14, 7], strides = [1, 1, 1]} : vector<8x14x13xf32> to vector<8x14x7xf32>
    %64 = arith.subf %63, %53 : vector<8x14x7xf32>
    %cst_16 = arith.constant 0.000000e+00 : f32
    %65 = vector.broadcast %cst_16 : f32 to vector<8x14x7xf32>
    %66 = arith.maximumf %64, %65 : vector<8x14x7xf32>
    %cst_17 = arith.constant dense<0.000000e+00> : vector<8x14xf32>
    %67 = vector.multi_reduction <add>, %66, %cst_17 [2] : vector<8x14x7xf32> to vector<8x14xf32>
    %68 = arith.addf %62, %67 : vector<8x14xf32>
    %69 = vector.extract_strided_slice %43 {offsets = [0, 0, 10], sizes = [8, 14, 3], strides = [1, 1, 1]} : vector<8x14x13xf32> to vector<8x14x3xf32>
    %70 = arith.subf %69, %57 : vector<8x14x3xf32>
    %cst_18 = arith.constant 0.000000e+00 : f32
    %71 = vector.broadcast %cst_18 : f32 to vector<8x14x3xf32>
    %72 = arith.maximumf %70, %71 : vector<8x14x3xf32>
    %cst_19 = arith.constant dense<0.000000e+00> : vector<8x14xf32>
    %73 = vector.multi_reduction <add>, %72, %cst_19 [2] : vector<8x14x3xf32> to vector<8x14xf32>
    %74 = arith.addf %68, %73 : vector<8x14xf32>
    %cst_20 = arith.constant dense<0.000000e+00> : vector<8xf32>
    %75 = vector.multi_reduction <add>, %74, %cst_20 [1] : vector<8x14xf32> to vector<8xf32>
    %76 = vector.shape_cast %75 : vector<8xf32> to vector<8x1xf32>
    %77 = arith.maximumf %38, %76 : vector<8x1xf32>
    %c0_21 = arith.constant 0 : index
    %c0_22 = arith.constant 0 : index
    %78 = vector.load %arg2[%c0_21, %c0_22] : memref<8x1xf32, #tpu.memory_space<vmem>>, vector<8x1xf32>
    tpu.vector_store %arg2[%c0_21, %c0_22], %77 {strides = array<i32>} : memref<8x1xf32, #tpu.memory_space<vmem>>, vector<8x1xf32>,
    return
  }
  func.func @transform_0(%arg0: i32) -> (i32, i32, i32) {
    %c0_i32 = arith.constant 0 : i32
    %c0_i32_0 = arith.constant 0 : i32
    %c0_i32_1 = arith.constant 0 : i32
    return %arg0, %c0_i32, %c0_i32_0 : i32, i32, i32
  }
  func.func @transform_1(%arg0: i32) -> (i32, i32) {
    %c0_i32 = arith.constant 0 : i32
    %c0_i32_0 = arith.constant 0 : i32
    return %arg0, %c0_i32 : i32, i32
  }
}

</mosaic_0001>

<llo_original>
// kernel: squeeze.1
$region0: #{squeeze.1}
  %s0 = inlined_call_operand.vmem [shape: f32[8], index: 0, kind: input, shape index: {}]
  %s1 = inlined_call_operand.hbm [shape: f32[2,4], index: 1, kind: output, shape index: {}]
  $region1: #{squeeze.1} parent=0
    #allocation0 [shape = 'u8[1024]{0}', space=vmem, size = 0x400, scoped, tag = 'operand span for operand 1']
    #allocation1 [shape = 's32[1]{0}', space=sflag, size = 0x4, scoped, tag = 'scoped memory for squeeze.1']
    #allocation2 [shape = 'u8[4096]{0}', space=vmem, size = 0x1000, scoped, tag = 'scoped mem for output reshape']
    #allocation3 [shape = 'u8[4096]{0}', space=vmem, size = 0x1000, scoped, tag = 'scoped mem for input reshape']
    %2 = vsyncpa [#allocation1], 0
    %s4 = sshll.u32 1, 1
    %s5 = ssub.s32 %s4, 1
    %v6 = vld [vmem:[%s0] sm:%s5]
    %7 = vst [vmem:[#allocation3] sm:%s5] %v6
    %v8 = vld [vmem:[#allocation3] sm:$0x1]
    %vm9 = vcmask 31744
    %10 = vst.msk [vmem:[#allocation2] sm:$0x1] %vm9, %v8
    %v11 = vld [vmem:[#allocation3] sm:$0x1]
    %12 = vrot.lane.b32.xlu0 %v11, 124
    %v13 = vpop.permute.xlu0 %12
    %vm14 = vcmask 31744
    %s15 = scalar_lea.vmem [#allocation2], 1
    %16 = vst.msk [vmem:[%s15] sm:$0x1] %vm14, %v13
    %s18 = sshll.u32 1, 2
    %s19 = ssub.s32 %s18, 1
    %v21 = vld [vmem:[#allocation2] sm:%s19]
    %s22 = sshll.u32 1, 2
    %s23 = ssub.s32 %s22, 1
    %24 = vst [vmem:[#allocation0] sm:%s23] %v21
    %s26 = ssub.s32 32, 32
    %27 = vsyncadd [#allocation1], %s26
    %s29 = sshll.u32 [#allocation0], 4
    %s30 = int_to_ptr.vmem [resolvable:$true] %s29
    %32 = dma.vmem_to_hbm [thread:$0]  %s30, 32, %s1, [#allocation1]
    %33 = dma.done [#allocation1], 32
    %34 = vsyncpa [#allocation1], 1

// kernel: bm_forward.1
$region0: #{bm_forward.1}
  #allocation0 [shape = 'u32[]', space=smem, size = 0x4, offset = 0x4, fixed_abs, tag = 'smem constant byte address 0x4 - core index']
  #allocation1 [shape = 'u32[144,128]{1,0:T(1,128)}', space=vmem, size = 0x12000, scoped, tag = 'internal scratch']
  %s0 = inlined_call_operand.hbm [shape: f32[8,16,16], index: 0, kind: input, shape index: {}]
  %s1 = inlined_call_operand.vmem [shape: f32[8,1], index: 1, kind: output, shape index: {}]
  %s2 = sld [smem:[#allocation0]]
  $region18: #{bm_forward.1} parent=0
    _
  %s4 = ssub.s32 1, %s2
  %s5 = scalar_select 0, %s4, %s2
  $region1: #{bm_forward.1} parent=0
    #allocation2 [shape = 'u8[65536]{0}', space=vmem, size = 0x10000, scoped, tag = 'input window, operand 0, single buffered']
    #allocation3 [shape = 's32[1]{0}', space=sflag, size = 0x4, scoped, tag = 'scoped memory for bm_forward.1']
    %6 = vsyncpa [#allocation3], 0
    // Predicated region
    $region2: #{bm_forward.1} parent=1 // pred_check
      _
    $region3: #{bm_forward.1} parent=1 // pred_check_branch
      %8 = sbr.rel (0) target = $region5
    $region4: #{bm_forward.1} parent=1 // pred_region
      %s10 = ssub.s32 2048, 2048
      %11 = vsyncadd [#allocation3], %s10
      %s12 = sshll.u32 [#allocation2], 4
      %s13 = int_to_ptr.vmem [resolvable:$true] %s12
      %18 = dma.hbm_to_vmem [thread:$0]  %s0, 2048, %s13, [#allocation3], 128, 128, 8
    $region5: #{bm_forward.1} parent=1 // pred_fallthru
      _
    // Predicated region
    $region6: #{bm_forward.1} parent=1 // pred_check
      _
    $region7: #{bm_forward.1} parent=1 // pred_check_branch
      %20 = sbr.rel (0) target = $region9
    $region8: #{bm_forward.1} parent=1 // pred_region
      %21 = dma.done [#allocation3], 2048
    $region9: #{bm_forward.1} parent=1 // pred_fallthru
      _
    %v22 = vld [vmem:[#allocation2] sm:$0xff]
    %v23 = vld [vmem:[#allocation2 + $0x8] sm:$0xff]
    %v24 = vld [vmem:[#allocation2 + $0x10] sm:$0xff]
    %v25 = vld [vmem:[#allocation2 + $0x18] sm:$0xff]
    %v26 = vld [vmem:[#allocation2 + $0x20] sm:$0xff]
    %v27 = vld [vmem:[#allocation2 + $0x28] sm:$0xff]
    %v28 = vld [vmem:[#allocation2 + $0x30] sm:$0xff]
    %v29 = vld [vmem:[#allocation2 + $0x38] sm:$0xff]
    %v30 = vld [vmem:[#allocation2 + $0x40] sm:$0xff]
    %v31 = vld [vmem:[#allocation2 + $0x48] sm:$0xff]
    %v32 = vld [vmem:[#allocation2 + $0x50] sm:$0xff]
    %v33 = vld [vmem:[#allocation2 + $0x58] sm:$0xff]
    %v34 = vld [vmem:[#allocation2 + $0x60] sm:$0xff]
    %v35 = vld [vmem:[#allocation2 + $0x68] sm:$0xff]
    %v36 = vld [vmem:[#allocation2 + $0x70] sm:$0xff]
    %v37 = vld [vmem:[#allocation2 + $0x78] sm:$0xff]
    %vm54 = vcmask 1046528
    %v55 = vrot.slane %v22, 1
    %v56 = vrot.slane %v23, 1
    %v57 = vsel %vm54, %v55, %v56
    %v58 = vrot.slane %v24, 1
    %v59 = vrot.slane %v25, 1
    %v60 = vsel %vm54, %v58, %v59
    %v61 = vrot.slane %v26, 1
    %v62 = vrot.slane %v27, 1
    %v63 = vsel %vm54, %v61, %v62
    %v64 = vrot.slane %v28, 1
    %v65 = vrot.slane %v29, 1
    %v66 = vsel %vm54, %v64, %v65
    %v67 = vrot.slane %v30, 1
    %v68 = vrot.slane %v31, 1
    %v69 = vsel %vm54, %v67, %v68
    %v70 = vrot.slane %v32, 1
    %v71 = vrot.slane %v33, 1
    %v72 = vsel %vm54, %v70, %v71
    %v73 = vrot.slane %v34, 1
    %v74 = vrot.slane %v35, 1
    %v75 = vsel %vm54, %v73, %v74
    %v76 = vrot.slane %v36, 1
    %v77 = vrot.slane %v37, 1
    %v78 = vsel %vm54, %v76, %v77
    %v95 = vsub.f32 %v22, %v57
    %v96 = vsub.f32 %v23, %v56
    %v97 = vsub.f32 %v24, %v60
    %v98 = vsub.f32 %v25, %v59
    %v99 = vsub.f32 %v26, %v63
    %v100 = vsub.f32 %v27, %v62
    %v101 = vsub.f32 %v28, %v66
    %v102 = vsub.f32 %v29, %v65
    %v103 = vsub.f32 %v30, %v69
    %v104 = vsub.f32 %v31, %v68
    %v105 = vsub.f32 %v32, %v72
    %v106 = vsub.f32 %v33, %v71
    %v107 = vsub.f32 %v34, %v75
    %v108 = vsub.f32 %v35, %v74
    %v109 = vsub.f32 %v36, %v78
    %v110 = vsub.f32 %v37, %v77
    %v111 = vand.u32 2147483647, %v95
    %v112 = vand.u32 2147483647, %v96
    %v113 = vand.u32 2147483647, %v97
    %v114 = vand.u32 2147483647, %v98
    %v115 = vand.u32 2147483647, %v99
    %v116 = vand.u32 2147483647, %v100
    %v117 = vand.u32 2147483647, %v101
    %v118 = vand.u32 2147483647, %v102
    %v119 = vand.u32 2147483647, %v103
    %v120 = vand.u32 2147483647, %v104
    %v121 = vand.u32 2147483647, %v105
    %v122 = vand.u32 2147483647, %v106
    %v123 = vand.u32 2147483647, %v107
    %v124 = vand.u32 2147483647, %v108
    %v125 = vand.u32 2147483647, %v109
    %v126 = vand.u32 2147483647, %v110
    %v127 = vand.u32 2147483647, %v22
    %v128 = vand.u32 2147483647, %v23
    %v129 = vand.u32 2147483647, %v24
    %v130 = vand.u32 2147483647, %v25
    %v131 = vand.u32 2147483647, %v26
    %v132 = vand.u32 2147483647, %v27
    %v133 = vand.u32 2147483647, %v28
    %v134 = vand.u32 2147483647, %v29
    %v135 = vand.u32 2147483647, %v30
    %v136 = vand.u32 2147483647, %v31
    %v137 = vand.u32 2147483647, %v32
    %v138 = vand.u32 2147483647, %v33
    %v139 = vand.u32 2147483647, %v34
    %v140 = vand.u32 2147483647, %v35
    %v141 = vand.u32 2147483647, %v36
    %v142 = vand.u32 2147483647, %v37
    %v143 = vmul.f32 %v127, 0.11111111
    %v144 = vmul.f32 %v128, 0.11111111
    %v145 = vmul.f32 %v129, 0.11111111
    %v146 = vmul.f32 %v130, 0.11111111
    %v147 = vmul.f32 %v131, 0.11111111
    %v148 = vmul.f32 %v132, 0.11111111
    %v149 = vmul.f32 %v133, 0.11111111
    %v150 = vmul.f32 %v134, 0.11111111
    %v151 = vmul.f32 %v135, 0.11111111
    %v152 = vmul.f32 %v136, 0.11111111
    %v153 = vmul.f32 %v137, 0.11111111
    %v154 = vmul.f32 %v138, 0.11111111
    %v155 = vmul.f32 %v139, 0.11111111
    %v156 = vmul.f32 %v140, 0.11111111
    %v157 = vmul.f32 %v141, 0.11111111
    %v158 = vmul.f32 %v142, 0.11111111
    %v159 = vsub.f32 %v22, %v56
    %v160 = vsub.f32 %v24, %v59
    %v161 = vsub.f32 %v26, %v62
    %v162 = vsub.f32 %v28, %v65
    %v163 = vsub.f32 %v30, %v68
    %v164 = vsub.f32 %v32, %v71
    %v165 = vsub.f32 %v34, %v74
    %v166 = vsub.f32 %v36, %v77
    %v167 = vand.u32 2147483647, %v159
    %v168 = vand.u32 2147483647, %v160
    %v169 = vand.u32 2147483647, %v161
    %v170 = vand.u32 2147483647, %v162
    %v171 = vand.u32 2147483647, %v163
    %v172 = vand.u32 2147483647, %v164
    %v173 = vand.u32 2147483647, %v165
    %v174 = vand.u32 2147483647, %v166
    %v175 = vmul.f32 %v167, 0.11111111
    %v176 = vmul.f32 %v168, 0.11111111
    %v177 = vmul.f32 %v169, 0.11111111
    %v178 = vmul.f32 %v170, 0.11111111
    %v179 = vmul.f32 %v171, 0.11111111
    %v180 = vmul.f32 %v172, 0.11111111
    %v181 = vmul.f32 %v173, 0.11111111
    %v182 = vmul.f32 %v174, 0.11111111
    %vm199 = vcmask 1042432
    %v200 = vrot.slane %v143, 5
    %v201 = vrot.slane %v144, 5
    %v202 = vsel %vm199, %v200, %v201
    %v203 = vrot.slane %v145, 5
    %v204 = vrot.slane %v146, 5
    %v205 = vsel %vm199, %v203, %v204
    %v206 = vrot.slane %v147, 5
    %v207 = vrot.slane %v148, 5
    %v208 = vsel %vm199, %v206, %v207
    %v209 = vrot.slane %v149, 5
    %v210 = vrot.slane %v150, 5
    %v211 = vsel %vm199, %v209, %v210
    %v212 = vrot.slane %v151, 5
    %v213 = vrot.slane %v152, 5
    %v214 = vsel %vm199, %v212, %v213
    %v215 = vrot.slane %v153, 5
    %v216 = vrot.slane %v154, 5
    %v217 = vsel %vm199, %v215, %v216
    %v218 = vrot.slane %v155, 5
    %v219 = vrot.slane %v156, 5
    %v220 = vsel %vm199, %v218, %v219
    %v221 = vrot.slane %v157, 5
    %v222 = vrot.slane %v158, 5
    %v223 = vsel %vm199, %v221, %v222
    %v232 = vsub.f32 %v111, %v202
    %v233 = vsub.f32 %v113, %v205
    %v234 = vsub.f32 %v115, %v208
    %v235 = vsub.f32 %v117, %v211
    %v236 = vsub.f32 %v119, %v214
    %v237 = vsub.f32 %v121, %v217
    %v238 = vsub.f32 %v123, %v220
    %v239 = vsub.f32 %v125, %v223
    %v240 = vmax.f32 %v232, 0.0
    %v241 = vmax.f32 %v233, 0.0
    %v242 = vmax.f32 %v234, 0.0
    %v243 = vmax.f32 %v235, 0.0
    %v244 = vmax.f32 %v236, 0.0
    %v245 = vmax.f32 %v237, 0.0
    %v246 = vmax.f32 %v238, 0.0
    %v247 = vmax.f32 %v239, 0.0
    %v256 = vrot.slane %v240, 1
    %v257 = vrot.slane %v241, 1
    %v258 = vrot.slane %v242, 1
    %v259 = vrot.slane %v243, 1
    %v260 = vrot.slane %v244, 1
    %v261 = vrot.slane %v245, 1
    %v262 = vrot.slane %v246, 1
    %v263 = vrot.slane %v247, 1
    %vm272 = vcmask 124928
    %v273 = vsel %vm272, %v256, 0.0
    %v274 = vrot.slane %v273, 4
    %v275 = vadd.f32 %v273, %v274
    %v276 = vrot.slane %v275, 2
    %v277 = vadd.f32 %v275, %v276
    %v278 = vrot.slane %v277, 1
    %v279 = vadd.f32 %v277, %v278
    %v280 = vsel %vm272, %v257, 0.0
    %v281 = vrot.slane %v280, 4
    %v282 = vadd.f32 %v280, %v281
    %v283 = vrot.slane %v282, 2
    %v284 = vadd.f32 %v282, %v283
    %v285 = vrot.slane %v284, 1
    %v286 = vadd.f32 %v284, %v285
    %v287 = vsel %vm272, %v258, 0.0
    %v288 = vrot.slane %v287, 4
    %v289 = vadd.f32 %v287, %v288
    %v290 = vrot.slane %v289, 2
    %v291 = vadd.f32 %v289, %v290
    %v292 = vrot.slane %v291, 1
    %v293 = vadd.f32 %v291, %v292
    %v294 = vsel %vm272, %v259, 0.0
    %v295 = vrot.slane %v294, 4
    %v296 = vadd.f32 %v294, %v295
    %v297 = vrot.slane %v296, 2
    %v298 = vadd.f32 %v296, %v297
    %v299 = vrot.slane %v298, 1
    %v300 = vadd.f32 %v298, %v299
    %v301 = vsel %vm272, %v260, 0.0
    %v302 = vrot.slane %v301, 4
    %v303 = vadd.f32 %v301, %v302
    %v304 = vrot.slane %v303, 2
    %v305 = vadd.f32 %v303, %v304
    %v306 = vrot.slane %v305, 1
    %v307 = vadd.f32 %v305, %v306
    %v308 = vsel %vm272, %v261, 0.0
    %v309 = vrot.slane %v308, 4
    %v310 = vadd.f32 %v308, %v309
    %v311 = vrot.slane %v310, 2
    %v312 = vadd.f32 %v310, %v311
    %v313 = vrot.slane %v312, 1
    %v314 = vadd.f32 %v312, %v313
    %v315 = vsel %vm272, %v262, 0.0
    %v316 = vrot.slane %v315, 4
    %v317 = vadd.f32 %v315, %v316
    %v318 = vrot.slane %v317, 2
    %v319 = vadd.f32 %v317, %v318
    %v320 = vrot.slane %v319, 1
    %v321 = vadd.f32 %v319, %v320
    %v322 = vsel %vm272, %v263, 0.0
    %v323 = vrot.slane %v322, 4
    %v324 = vadd.f32 %v322, %v323
    %v325 = vrot.slane %v324, 2
    %v326 = vadd.f32 %v324, %v325
    %v327 = vrot.slane %v326, 1
    %v328 = vadd.f32 %v326, %v327
    %v337 = vrot.slane %v175, 4
    %v338 = vrot.slane %v176, 4
    %v339 = vrot.slane %v177, 4
    %v340 = vrot.slane %v178, 4
    %v341 = vrot.slane %v179, 4
    %v342 = vrot.slane %v180, 4
    %v343 = vrot.slane %v181, 4
    %v344 = vrot.slane %v182, 4
    %v353 = vsub.f32 %v111, %v337
    %v354 = vsub.f32 %v112, %v337
    %v355 = vsub.f32 %v113, %v338
    %v356 = vsub.f32 %v114, %v338
    %v357 = vsub.f32 %v115, %v339
    %v358 = vsub.f32 %v116, %v339
    %v359 = vsub.f32 %v117, %v340
    %v360 = vsub.f32 %v118, %v340
    %v361 = vsub.f32 %v119, %v341
    %v362 = vsub.f32 %v120, %v341
    %v363 = vsub.f32 %v121, %v342
    %v364 = vsub.f32 %v122, %v342
    %v365 = vsub.f32 %v123, %v343
    %v366 = vsub.f32 %v124, %v343
    %v367 = vsub.f32 %v125, %v344
    %v368 = vsub.f32 %v126, %v344
    %v369 = vmax.f32 %v353, 0.0
    %v370 = vmax.f32 %v354, 0.0
    %v371 = vmax.f32 %v355, 0.0
    %v372 = vmax.f32 %v356, 0.0
    %v373 = vmax.f32 %v357, 0.0
    %v374 = vmax.f32 %v358, 0.0
    %v375 = vmax.f32 %v359, 0.0
    %v376 = vmax.f32 %v360, 0.0
    %v377 = vmax.f32 %v361, 0.0
    %v378 = vmax.f32 %v362, 0.0
    %v379 = vmax.f32 %v363, 0.0
    %v380 = vmax.f32 %v364, 0.0
    %v381 = vmax.f32 %v365, 0.0
    %v382 = vmax.f32 %v366, 0.0
    %v383 = vmax.f32 %v367, 0.0
    %v384 = vmax.f32 %v368, 0.0
    %vm401 = vcmask 1043456
    %v402 = vrot.slane %v369, 4
    %v403 = vrot.slane %v370, 4
    %v404 = vsel %vm401, %v402, %v403
    %v405 = vrot.slane %v371, 4
    %v406 = vrot.slane %v372, 4
    %v407 = vsel %vm401, %v405, %v406
    %v408 = vrot.slane %v373, 4
    %v409 = vrot.slane %v374, 4
    %v410 = vsel %vm401, %v408, %v409
    %v411 = vrot.slane %v375, 4
    %v412 = vrot.slane %v376, 4
    %v413 = vsel %vm401, %v411, %v412
    %v414 = vrot.slane %v377, 4
    %v415 = vrot.slane %v378, 4
    %v416 = vsel %vm401, %v414, %v415
    %v417 = vrot.slane %v379, 4
    %v418 = vrot.slane %v380, 4
    %v419 = vsel %vm401, %v417, %v418
    %v420 = vrot.slane %v381, 4
    %v421 = vrot.slane %v382, 4
    %v422 = vsel %vm401, %v420, %v421
    %v423 = vrot.slane %v383, 4
    %v424 = vrot.slane %v384, 4
    %v425 = vsel %vm401, %v423, %v424
    %vm434 = vcmask 129024
    %v435 = vsel %vm434, %v404, 0.0
    %v436 = vrot.slane %v435, 4
    %v437 = vadd.f32 %v435, %v436
    %v438 = vrot.slane %v437, 2
    %v439 = vadd.f32 %v437, %v438
    %v440 = vrot.slane %v439, 1
    %v441 = vadd.f32 %v439, %v440
    %v442 = vsel %vm434, %v407, 0.0
    %v443 = vrot.slane %v442, 4
    %v444 = vadd.f32 %v442, %v443
    %v445 = vrot.slane %v444, 2
    %v446 = vadd.f32 %v444, %v445
    %v447 = vrot.slane %v446, 1
    %v448 = vadd.f32 %v446, %v447
    %v449 = vsel %vm434, %v410, 0.0
    %v450 = vrot.slane %v449, 4
    %v451 = vadd.f32 %v449, %v450
    %v452 = vrot.slane %v451, 2
    %v453 = vadd.f32 %v451, %v452
    %v454 = vrot.slane %v453, 1
    %v455 = vadd.f32 %v453, %v454
    %v456 = vsel %vm434, %v413, 0.0
    %v457 = vrot.slane %v456, 4
    %v458 = vadd.f32 %v456, %v457
    %v459 = vrot.slane %v458, 2
    %v460 = vadd.f32 %v458, %v459
    %v461 = vrot.slane %v460, 1
    %v462 = vadd.f32 %v460, %v461
    %v463 = vsel %vm434, %v416, 0.0
    %v464 = vrot.slane %v463, 4
    %v465 = vadd.f32 %v463, %v464
    %v466 = vrot.slane %v465, 2
    %v467 = vadd.f32 %v465, %v466
    %v468 = vrot.slane %v467, 1
    %v469 = vadd.f32 %v467, %v468
    %v470 = vsel %vm434, %v419, 0.0
    %v471 = vrot.slane %v470, 4
    %v472 = vadd.f32 %v470, %v471
    %v473 = vrot.slane %v472, 2
    %v474 = vadd.f32 %v472, %v473
    %v475 = vrot.slane %v474, 1
    %v476 = vadd.f32 %v474, %v475
    %v477 = vsel %vm434, %v422, 0.0
    %v478 = vrot.slane %v477, 4
    %v479 = vadd.f32 %v477, %v478
    %v480 = vrot.slane %v479, 2
    %v481 = vadd.f32 %v479, %v480
    %v482 = vrot.slane %v481, 1
    %v483 = vadd.f32 %v481, %v482
    %v484 = vsel %vm434, %v425, 0.0
    %v485 = vrot.slane %v484, 4
    %v486 = vadd.f32 %v484, %v485
    %v487 = vrot.slane %v486, 2
    %v488 = vadd.f32 %v486, %v487
    %v489 = vrot.slane %v488, 1
    %v490 = vadd.f32 %v488, %v489
    %v491 = vadd.f32 %v279, %v441
    %v492 = vadd.f32 %v286, %v448
    %v493 = vadd.f32 %v293, %v455
    %v494 = vadd.f32 %v300, %v462
    %v495 = vadd.f32 %v307, %v469
    %v496 = vadd.f32 %v314, %v476
    %v497 = vadd.f32 %v321, %v483
    %v498 = vadd.f32 %v328, %v490
    %v499 = vrot.slane %v143, 4
    %v500 = vrot.slane %v144, 4
    %v501 = vsel %vm401, %v499, %v500
    %v502 = vrot.slane %v145, 4
    %v503 = vrot.slane %v146, 4
    %v504 = vsel %vm401, %v502, %v503
    %v505 = vrot.slane %v147, 4
    %v506 = vrot.slane %v148, 4
    %v507 = vsel %vm401, %v505, %v506
    %v508 = vrot.slane %v149, 4
    %v509 = vrot.slane %v150, 4
    %v510 = vsel %vm401, %v508, %v509
    %v511 = vrot.slane %v151, 4
    %v512 = vrot.slane %v152, 4
    %v513 = vsel %vm401, %v511, %v512
    %v514 = vrot.slane %v153, 4
    %v515 = vrot.slane %v154, 4
    %v516 = vsel %vm401, %v514, %v515
    %v517 = vrot.slane %v155, 4
    %v518 = vrot.slane %v156, 4
    %v519 = vsel %vm401, %v517, %v518
    %v520 = vrot.slane %v157, 4
    %v521 = vrot.slane %v158, 4
    %v522 = vsel %vm401, %v520, %v521
    %v531 = vsub.f32 %v112, %v501
    %v532 = vsub.f32 %v114, %v504
    %v533 = vsub.f32 %v116, %v507
    %v534 = vsub.f32 %v118, %v510
    %v535 = vsub.f32 %v120, %v513
    %v536 = vsub.f32 %v122, %v516
    %v537 = vsub.f32 %v124, %v519
    %v538 = vsub.f32 %v126, %v522
    %v539 = vmax.f32 %v531, 0.0
    %v540 = vmax.f32 %v532, 0.0
    %v541 = vmax.f32 %v533, 0.0
    %v542 = vmax.f32 %v534, 0.0
    %v543 = vmax.f32 %v535, 0.0
    %v544 = vmax.f32 %v536, 0.0
    %v545 = vmax.f32 %v537, 0.0
    %v546 = vmax.f32 %v538, 0.0
    %v555 = vrot.slane %v539, 3
    %v556 = vrot.slane %v540, 3
    %v557 = vrot.slane %v541, 3
    %v558 = vrot.slane %v542, 3
    %v559 = vrot.slane %v543, 3
    %v560 = vrot.slane %v544, 3
    %v561 = vrot.slane %v545, 3
    %v562 = vrot.slane %v546, 3
    %v571 = vsel %vm272, %v555, 0.0
    %v572 = vrot.slane %v571, 4
    %v573 = vadd.f32 %v571, %v572
    %v574 = vrot.slane %v573, 2
    %v575 = vadd.f32 %v573, %v574
    %v576 = vrot.slane %v575, 1
    %v577 = vadd.f32 %v575, %v576
    %v578 = vsel %vm272, %v556, 0.0
    %v579 = vrot.slane %v578, 4
    %v580 = vadd.f32 %v578, %v579
    %v581 = vrot.slane %v580, 2
    %v582 = vadd.f32 %v580, %v581
    %v583 = vrot.slane %v582, 1
    %v584 = vadd.f32 %v582, %v583
    %v585 = vsel %vm272, %v557, 0.0
    %v586 = vrot.slane %v585, 4
    %v587 = vadd.f32 %v585, %v586
    %v588 = vrot.slane %v587, 2
    %v589 = vadd.f32 %v587, %v588
    %v590 = vrot.slane %v589, 1
    %v591 = vadd.f32 %v589, %v590
    %v592 = vsel %vm272, %v558, 0.0
    %v593 = vrot.slane %v592, 4
    %v594 = vadd.f32 %v592, %v593
    %v595 = vrot.slane %v594, 2
    %v596 = vadd.f32 %v594, %v595
    %v597 = vrot.slane %v596, 1
    %v598 = vadd.f32 %v596, %v597
    %v599 = vsel %vm272, %v559, 0.0
    %v600 = vrot.slane %v599, 4
    %v601 = vadd.f32 %v599, %v600
    %v602 = vrot.slane %v601, 2
    %v603 = vadd.f32 %v601, %v602
    %v604 = vrot.slane %v603, 1
    %v605 = vadd.f32 %v603, %v604
    %v606 = vsel %vm272, %v560, 0.0
    %v607 = vrot.slane %v606, 4
    %v608 = vadd.f32 %v606, %v607
    %v609 = vrot.slane %v608, 2
    %v610 = vadd.f32 %v608, %v609
    %v611 = vrot.slane %v610, 1
    %v612 = vadd.f32 %v610, %v611
    %v613 = vsel %vm272, %v561, 0.0
    %v614 = vrot.slane %v613, 4
    %v615 = vadd.f32 %v613, %v614
    %v616 = vrot.slane %v615, 2
    %v617 = vadd.f32 %v615, %v616
    %v618 = vrot.slane %v617, 1
    %v619 = vadd.f32 %v617, %v618
    %v620 = vsel %vm272, %v562, 0.0
    %v621 = vrot.slane %v620, 4
    %v622 = vadd.f32 %v620, %v621
    %v623 = vrot.slane %v622, 2
    %v624 = vadd.f32 %v622, %v623
    %v625 = vrot.slane %v624, 1
    %v626 = vadd.f32 %v624, %v625
    %v627 = vadd.f32 %v491, %v577
    %v628 = vadd.f32 %v492, %v584
    %v629 = vadd.f32 %v493, %v591
    %v630 = vadd.f32 %v494, %v598
    %v631 = vadd.f32 %v495, %v605
    %v632 = vadd.f32 %v496, %v612
    %v633 = vadd.f32 %v497, %v619
    %v634 = vadd.f32 %v498, %v626
    %vm643 = vcmask 1041409
    %v644 = vsel %vm643, %v628, %v627
    %vm645 = vcmask 1042434
    %v646 = vsel %vm645, %v629, %v644
    %vm647 = vcmask 1043459
    %v648 = vsel %vm647, %v630, %v646
    %vm649 = vcmask 1044484
    %v650 = vsel %vm649, %v631, %v648
    %vm651 = vcmask 1045509
    %v652 = vsel %vm651, %v632, %v650
    %vm653 = vcmask 1046534
    %v654 = vsel %vm653, %v633, %v652
    %vm655 = vcmask 1047559
    %v656 = vsel %vm655, %v634, %v654
    %657 = vrot.lane.b32.xlu0 %v656, 127
    %v658 = vpop.permute.xlu0 %657
    %vm660 = vcmask 113664
    %v661 = vsel %vm660, %v658, 0.0
    %662 = vadd.xlane.f32.xlu0 %v661
    %v663 = vpop.xlane.xlu0 %662
    %664 = vrot.lane.b32.xlu0 %v22, 127
    %v665 = vpop.permute.xlu0 %664
    %666 = vrot.lane.b32.xlu0 %v23, 127
    %v667 = vpop.permute.xlu0 %666
    %668 = vrot.lane.b32.xlu0 %v24, 127
    %v669 = vpop.permute.xlu0 %668
    %670 = vrot.lane.b32.xlu0 %v25, 127
    %v671 = vpop.permute.xlu0 %670
    %672 = vrot.lane.b32.xlu0 %v26, 127
    %v673 = vpop.permute.xlu0 %672
    %674 = vrot.lane.b32.xlu0 %v27, 127
    %v675 = vpop.permute.xlu0 %674
    %676 = vrot.lane.b32.xlu0 %v28, 127
    %v677 = vpop.permute.xlu0 %676
    %678 = vrot.lane.b32.xlu0 %v29, 127
    %v679 = vpop.permute.xlu0 %678
    %680 = vrot.lane.b32.xlu0 %v30, 127
    %v681 = vpop.permute.xlu0 %680
    %682 = vrot.lane.b32.xlu0 %v31, 127
    %v683 = vpop.permute.xlu0 %682
    %684 = vrot.lane.b32.xlu0 %v32, 127
    %v685 = vpop.permute.xlu0 %684
    %686 = vrot.lane.b32.xlu0 %v33, 127
    %v687 = vpop.permute.xlu0 %686
    %688 = vrot.lane.b32.xlu0 %v34, 127
    %v689 = vpop.permute.xlu0 %688
    %690 = vrot.lane.b32.xlu0 %v35, 127
    %v691 = vpop.permute.xlu0 %690
    %692 = vrot.lane.b32.xlu0 %v36, 127
    %v693 = vpop.permute.xlu0 %692
    %694 = vrot.lane.b32.xlu0 %v37, 127
    %v695 = vpop.permute.xlu0 %694
    %v712 = vsub.f32 %v22, %v665
    %v713 = vsub.f32 %v23, %v667
    %v714 = vsub.f32 %v24, %v669
    %v715 = vsub.f32 %v25, %v671
    %v716 = vsub.f32 %v26, %v673
    %v717 = vsub.f32 %v27, %v675
    %v718 = vsub.f32 %v28, %v677
    %v719 = vsub.f32 %v29, %v679
    %v720 = vsub.f32 %v30, %v681
    %v721 = vsub.f32 %v31, %v683
    %v722 = vsub.f32 %v32, %v685
    %v723 = vsub.f32 %v33, %v687
    %v724 = vsub.f32 %v34, %v689
    %v725 = vsub.f32 %v35, %v691
    %v726 = vsub.f32 %v36, %v693
    %v727 = vsub.f32 %v37, %v695
    %v728 = vand.u32 2147483647, %v712
    %v729 = vand.u32 2147483647, %v713
    %v730 = vand.u32 2147483647, %v714
    %v731 = vand.u32 2147483647, %v715
    %v732 = vand.u32 2147483647, %v716
    %v733 = vand.u32 2147483647, %v717
    %v734 = vand.u32 2147483647, %v718
    %v735 = vand.u32 2147483647, %v719
    %v736 = vand.u32 2147483647, %v720
    %v737 = vand.u32 2147483647, %v721
    %v738 = vand.u32 2147483647, %v722
    %v739 = vand.u32 2147483647, %v723
    %v740 = vand.u32 2147483647, %v724
    %v741 = vand.u32 2147483647, %v725
    %v742 = vand.u32 2147483647, %v726
    %v743 = vand.u32 2147483647, %v727
    %744 = vrot.lane.b32.xlu0 %v22, 119
    %v745 = vpop.permute.xlu0 %744
    %746 = vrot.lane.b32.xlu0 %v23, 119
    %v747 = vpop.permute.xlu0 %746
    %748 = vrot.lane.b32.xlu0 %v24, 119
    %v749 = vpop.permute.xlu0 %748
    %750 = vrot.lane.b32.xlu0 %v25, 119
    %v751 = vpop.permute.xlu0 %750
    %752 = vrot.lane.b32.xlu0 %v26, 119
    %v753 = vpop.permute.xlu0 %752
    %754 = vrot.lane.b32.xlu0 %v27, 119
    %v755 = vpop.permute.xlu0 %754
    %756 = vrot.lane.b32.xlu0 %v28, 119
    %v757 = vpop.permute.xlu0 %756
    %758 = vrot.lane.b32.xlu0 %v29, 119
    %v759 = vpop.permute.xlu0 %758
    %760 = vrot.lane.b32.xlu0 %v30, 119
    %v761 = vpop.permute.xlu0 %760
    %762 = vrot.lane.b32.xlu0 %v31, 119
    %v763 = vpop.permute.xlu0 %762
    %764 = vrot.lane.b32.xlu0 %v32, 119
    %v765 = vpop.permute.xlu0 %764
    %766 = vrot.lane.b32.xlu0 %v33, 119
    %v767 = vpop.permute.xlu0 %766
    %768 = vrot.lane.b32.xlu0 %v34, 119
    %v769 = vpop.permute.xlu0 %768
    %770 = vrot.lane.b32.xlu0 %v35, 119
    %v771 = vpop.permute.xlu0 %770
    %772 = vrot.lane.b32.xlu0 %v36, 119
    %v773 = vpop.permute.xlu0 %772
    %774 = vrot.lane.b32.xlu0 %v37, 119
    %v775 = vpop.permute.xlu0 %774
    %v792 = vsub.f32 %v22, %v745
    %v793 = vsub.f32 %v23, %v747
    %v794 = vsub.f32 %v24, %v749
    %v795 = vsub.f32 %v25, %v751
    %v796 = vsub.f32 %v26, %v753
    %v797 = vsub.f32 %v27, %v755
    %v798 = vsub.f32 %v28, %v757
    %v799 = vsub.f32 %v29, %v759
    %v800 = vsub.f32 %v30, %v761
    %v801 = vsub.f32 %v31, %v763
    %v802 = vsub.f32 %v32, %v765
    %v803 = vsub.f32 %v33, %v767
    %v804 = vsub.f32 %v34, %v769
    %v805 = vsub.f32 %v35, %v771
    %v806 = vsub.f32 %v36, %v773
    %v807 = vsub.f32 %v37, %v775
    %v808 = vand.u32 2147483647, %v792
    %v809 = vand.u32 2147483647, %v793
    %v810 = vand.u32 2147483647, %v794
    %v811 = vand.u32 2147483647, %v795
    %v812 = vand.u32 2147483647, %v796
    %v813 = vand.u32 2147483647, %v797
    %v814 = vand.u32 2147483647, %v798
    %v815 = vand.u32 2147483647, %v799
    %v816 = vand.u32 2147483647, %v800
    %v817 = vand.u32 2147483647, %v801
    %v818 = vand.u32 2147483647, %v802
    %v819 = vand.u32 2147483647, %v803
    %v820 = vand.u32 2147483647, %v804
    %v821 = vand.u32 2147483647, %v805
    %v822 = vand.u32 2147483647, %v806
    %v823 = vand.u32 2147483647, %v807
    %v824 = vmul.f32 %v808, 0.11111111
    %v825 = vmul.f32 %v809, 0.11111111
    %v826 = vmul.f32 %v810, 0.11111111
    %v827 = vmul.f32 %v811, 0.11111111
    %v828 = vmul.f32 %v812, 0.11111111
    %v829 = vmul.f32 %v813, 0.11111111
    %v830 = vmul.f32 %v814, 0.11111111
    %v831 = vmul.f32 %v815, 0.11111111
    %v832 = vmul.f32 %v816, 0.11111111
    %v833 = vmul.f32 %v817, 0.11111111
    %v834 = vmul.f32 %v818, 0.11111111
    %v835 = vmul.f32 %v819, 0.11111111
    %v836 = vmul.f32 %v820, 0.11111111
    %v837 = vmul.f32 %v821, 0.11111111
    %v838 = vmul.f32 %v822, 0.11111111
    %v839 = vmul.f32 %v823, 0.11111111
    %840 = vrot.lane.b32.xlu0 %v143, 123
    %v841 = vpop.permute.xlu0 %840
    %842 = vrot.lane.b32.xlu0 %v144, 123
    %v843 = vpop.permute.xlu0 %842
    %844 = vrot.lane.b32.xlu0 %v145, 123
    %v845 = vpop.permute.xlu0 %844
    %846 = vrot.lane.b32.xlu0 %v146, 123
    %v847 = vpop.permute.xlu0 %846
    %848 = vrot.lane.b32.xlu0 %v147, 123
    %v849 = vpop.permute.xlu0 %848
    %850 = vrot.lane.b32.xlu0 %v148, 123
    %v851 = vpop.permute.xlu0 %850
    %852 = vrot.lane.b32.xlu0 %v149, 123
    %v853 = vpop.permute.xlu0 %852
    %854 = vrot.lane.b32.xlu0 %v150, 123
    %v855 = vpop.permute.xlu0 %854
    %856 = vrot.lane.b32.xlu0 %v151, 123
    %v857 = vpop.permute.xlu0 %856
    %858 = vrot.lane.b32.xlu0 %v152, 123
    %v859 = vpop.permute.xlu0 %858
    %860 = vrot.lane.b32.xlu0 %v153, 123
    %v861 = vpop.permute.xlu0 %860
    %862 = vrot.lane.b32.xlu0 %v154, 123
    %v863 = vpop.permute.xlu0 %862
    %864 = vrot.lane.b32.xlu0 %v155, 123
    %v865 = vpop.permute.xlu0 %864
    %866 = vrot.lane.b32.xlu0 %v156, 123
    %v867 = vpop.permute.xlu0 %866
    %868 = vrot.lane.b32.xlu0 %v157, 123
    %v869 = vpop.permute.xlu0 %868
    %870 = vrot.lane.b32.xlu0 %v158, 123
    %v871 = vpop.permute.xlu0 %870
    %v888 = vsub.f32 %v728, %v841
    %v889 = vsub.f32 %v729, %v843
    %v890 = vsub.f32 %v730, %v845
    %v891 = vsub.f32 %v731, %v847
    %v892 = vsub.f32 %v732, %v849
    %v893 = vsub.f32 %v733, %v851
    %v894 = vsub.f32 %v734, %v853
    %v895 = vsub.f32 %v735, %v855
    %v896 = vsub.f32 %v736, %v857
    %v897 = vsub.f32 %v737, %v859
    %v898 = vsub.f32 %v738, %v861
    %v899 = vsub.f32 %v739, %v863
    %v900 = vsub.f32 %v740, %v865
    %v901 = vsub.f32 %v741, %v867
    %v902 = vsub.f32 %v742, %v869
    %v903 = vsub.f32 %v743, %v871
    %v904 = vmax.f32 %v888, 0.0
    %v905 = vmax.f32 %v889, 0.0
    %v906 = vmax.f32 %v890, 0.0
    %v907 = vmax.f32 %v891, 0.0
    %v908 = vmax.f32 %v892, 0.0
    %v909 = vmax.f32 %v893, 0.0
    %v910 = vmax.f32 %v894, 0.0
    %v911 = vmax.f32 %v895, 0.0
    %v912 = vmax.f32 %v896, 0.0
    %v913 = vmax.f32 %v897, 0.0
    %v914 = vmax.f32 %v898, 0.0
    %v915 = vmax.f32 %v899, 0.0
    %v916 = vmax.f32 %v900, 0.0
    %v917 = vmax.f32 %v901, 0.0
    %v918 = vmax.f32 %v902, 0.0
    %v919 = vmax.f32 %v903, 0.0
    %936 = vrot.lane.b32.xlu0 %v904, 127
    %v937 = vpop.permute.xlu0 %936
    %938 = vrot.lane.b32.xlu0 %v905, 127
    %v939 = vpop.permute.xlu0 %938
    %940 = vrot.lane.b32.xlu0 %v906, 127
    %v941 = vpop.permute.xlu0 %940
    %942 = vrot.lane.b32.xlu0 %v907, 127
    %v943 = vpop.permute.xlu0 %942
    %944 = vrot.lane.b32.xlu0 %v908, 127
    %v945 = vpop.permute.xlu0 %944
    %946 = vrot.lane.b32.xlu0 %v909, 127
    %v947 = vpop.permute.xlu0 %946
    %948 = vrot.lane.b32.xlu0 %v910, 127
    %v949 = vpop.permute.xlu0 %948
    %950 = vrot.lane.b32.xlu0 %v911, 127
    %v951 = vpop.permute.xlu0 %950
    %952 = vrot.lane.b32.xlu0 %v912, 127
    %v953 = vpop.permute.xlu0 %952
    %954 = vrot.lane.b32.xlu0 %v913, 127
    %v955 = vpop.permute.xlu0 %954
    %956 = vrot.lane.b32.xlu0 %v914, 127
    %v957 = vpop.permute.xlu0 %956
    %958 = vrot.lane.b32.xlu0 %v915, 127
    %v959 = vpop.permute.xlu0 %958
    %960 = vrot.lane.b32.xlu0 %v916, 127
    %v961 = vpop.permute.xlu0 %960
    %962 = vrot.lane.b32.xlu0 %v917, 127
    %v963 = vpop.permute.xlu0 %962
    %964 = vrot.lane.b32.xlu0 %v918, 127
    %v965 = vpop.permute.xlu0 %964
    %966 = vrot.lane.b32.xlu0 %v919, 127
    %v967 = vpop.permute.xlu0 %966
    %vm984 = vcmask 23553
    %v985 = vsel %vm984, %v937, 0.0
    %986 = vadd.xlane.f32.xlu0 %v985
    %v987 = vpop.xlane.xlu0 %986
    %vm988 = vcmask 22528
    %v989 = vsel %vm988, %v939, 0.0
    %990 = vadd.xlane.f32.xlu0 %v989
    %v991 = vpop.xlane.xlu0 %990
    %v992 = vsel %vm984, %v941, 0.0
    %993 = vadd.xlane.f32.xlu0 %v992
    %v994 = vpop.xlane.xlu0 %993
    %v995 = vsel %vm988, %v943, 0.0
    %996 = vadd.xlane.f32.xlu0 %v995
    %v997 = vpop.xlane.xlu0 %996
    %v998 = vsel %vm984, %v945, 0.0
    %999 = vadd.xlane.f32.xlu0 %v998
    %v1000 = vpop.xlane.xlu0 %999
    %v1001 = vsel %vm988, %v947, 0.0
    %1002 = vadd.xlane.f32.xlu0 %v1001
    %v1003 = vpop.xlane.xlu0 %1002
    %v1004 = vsel %vm984, %v949, 0.0
    %1005 = vadd.xlane.f32.xlu0 %v1004
    %v1006 = vpop.xlane.xlu0 %1005
    %v1007 = vsel %vm988, %v951, 0.0
    %1008 = vadd.xlane.f32.xlu0 %v1007
    %v1009 = vpop.xlane.xlu0 %1008
    %v1010 = vsel %vm984, %v953, 0.0
    %1011 = vadd.xlane.f32.xlu0 %v1010
    %v1012 = vpop.xlane.xlu0 %1011
    %v1013 = vsel %vm988, %v955, 0.0
    %1014 = vadd.xlane.f32.xlu0 %v1013
    %v1015 = vpop.xlane.xlu0 %1014
    %v1016 = vsel %vm984, %v957, 0.0
    %1017 = vadd.xlane.f32.xlu0 %v1016
    %v1018 = vpop.xlane.xlu0 %1017
    %v1019 = vsel %vm988, %v959, 0.0
    %1020 = vadd.xlane.f32.xlu0 %v1019
    %v1021 = vpop.xlane.xlu0 %1020
    %v1022 = vsel %vm984, %v961, 0.0
    %1023 = vadd.xlane.f32.xlu0 %v1022
    %v1024 = vpop.xlane.xlu0 %1023
    %v1025 = vsel %vm988, %v963, 0.0
    %1026 = vadd.xlane.f32.xlu0 %v1025
    %v1027 = vpop.xlane.xlu0 %1026
    %v1028 = vsel %vm984, %v965, 0.0
    %1029 = vadd.xlane.f32.xlu0 %v1028
    %v1030 = vpop.xlane.xlu0 %1029
    %v1031 = vsel %vm988, %v967, 0.0
    %1032 = vadd.xlane.f32.xlu0 %v1031
    %v1033 = vpop.xlane.xlu0 %1032
    %1050 = vrot.lane.b32.xlu0 %v824, 4
    %v1051 = vpop.permute.xlu0 %1050
    %1052 = vrot.lane.b32.xlu0 %v825, 4
    %v1053 = vpop.permute.xlu0 %1052
    %1054 = vrot.lane.b32.xlu0 %v826, 4
    %v1055 = vpop.permute.xlu0 %1054
    %1056 = vrot.lane.b32.xlu0 %v827, 4
    %v1057 = vpop.permute.xlu0 %1056
    %1058 = vrot.lane.b32.xlu0 %v828, 4
    %v1059 = vpop.permute.xlu0 %1058
    %1060 = vrot.lane.b32.xlu0 %v829, 4
    %v1061 = vpop.permute.xlu0 %1060
    %1062 = vrot.lane.b32.xlu0 %v830, 4
    %v1063 = vpop.permute.xlu0 %1062
    %1064 = vrot.lane.b32.xlu0 %v831, 4
    %v1065 = vpop.permute.xlu0 %1064
    %1066 = vrot.lane.b32.xlu0 %v832, 4
    %v1067 = vpop.permute.xlu0 %1066
    %1068 = vrot.lane.b32.xlu0 %v833, 4
    %v1069 = vpop.permute.xlu0 %1068
    %1070 = vrot.lane.b32.xlu0 %v834, 4
    %v1071 = vpop.permute.xlu0 %1070
    %1072 = vrot.lane.b32.xlu0 %v835, 4
    %v1073 = vpop.permute.xlu0 %1072
    %1074 = vrot.lane.b32.xlu0 %v836, 4
    %v1075 = vpop.permute.xlu0 %1074
    %1076 = vrot.lane.b32.xlu0 %v837, 4
    %v1077 = vpop.permute.xlu0 %1076
    %1078 = vrot.lane.b32.xlu0 %v838, 4
    %v1079 = vpop.permute.xlu0 %1078
    %1080 = vrot.lane.b32.xlu0 %v839, 4
    %v1081 = vpop.permute.xlu0 %1080
    %v1098 = vsub.f32 %v728, %v1051
    %v1099 = vsub.f32 %v729, %v1053
    %v1100 = vsub.f32 %v730, %v1055
    %v1101 = vsub.f32 %v731, %v1057
    %v1102 = vsub.f32 %v732, %v1059
    %v1103 = vsub.f32 %v733, %v1061
    %v1104 = vsub.f32 %v734, %v1063
    %v1105 = vsub.f32 %v735, %v1065
    %v1106 = vsub.f32 %v736, %v1067
    %v1107 = vsub.f32 %v737, %v1069
    %v1108 = vsub.f32 %v738, %v1071
    %v1109 = vsub.f32 %v739, %v1073
    %v1110 = vsub.f32 %v740, %v1075
    %v1111 = vsub.f32 %v741, %v1077
    %v1112 = vsub.f32 %v742, %v1079
    %v1113 = vsub.f32 %v743, %v1081
    %v1114 = vmax.f32 %v1098, 0.0
    %v1115 = vmax.f32 %v1099, 0.0
    %v1116 = vmax.f32 %v1100, 0.0
    %v1117 = vmax.f32 %v1101, 0.0
    %v1118 = vmax.f32 %v1102, 0.0
    %v1119 = vmax.f32 %v1103, 0.0
    %v1120 = vmax.f32 %v1104, 0.0
    %v1121 = vmax.f32 %v1105, 0.0
    %v1122 = vmax.f32 %v1106, 0.0
    %v1123 = vmax.f32 %v1107, 0.0
    %v1124 = vmax.f32 %v1108, 0.0
    %v1125 = vmax.f32 %v1109, 0.0
    %v1126 = vmax.f32 %v1110, 0.0
    %v1127 = vmax.f32 %v1111, 0.0
    %v1128 = vmax.f32 %v1112, 0.0
    %v1129 = vmax.f32 %v1113, 0.0
    %1146 = vrot.lane.b32.xlu0 %v1114, 124
    %v1147 = vpop.permute.xlu0 %1146
    %1148 = vrot.lane.b32.xlu0 %v1115, 124
    %v1149 = vpop.permute.xlu0 %1148
    %1150 = vrot.lane.b32.xlu0 %v1116, 124
    %v1151 = vpop.permute.xlu0 %1150
    %1152 = vrot.lane.b32.xlu0 %v1117, 124
    %v1153 = vpop.permute.xlu0 %1152
    %1154 = vrot.lane.b32.xlu0 %v1118, 124
    %v1155 = vpop.permute.xlu0 %1154
    %1156 = vrot.lane.b32.xlu0 %v1119, 124
    %v1157 = vpop.permute.xlu0 %1156
    %1158 = vrot.lane.b32.xlu0 %v1120, 124
    %v1159 = vpop.permute.xlu0 %1158
    %1160 = vrot.lane.b32.xlu0 %v1121, 124
    %v1161 = vpop.permute.xlu0 %1160
    %1162 = vrot.lane.b32.xlu0 %v1122, 124
    %v1163 = vpop.permute.xlu0 %1162
    %1164 = vrot.lane.b32.xlu0 %v1123, 124
    %v1165 = vpop.permute.xlu0 %1164
    %1166 = vrot.lane.b32.xlu0 %v1124, 124
    %v1167 = vpop.permute.xlu0 %1166
    %1168 = vrot.lane.b32.xlu0 %v1125, 124
    %v1169 = vpop.permute.xlu0 %1168
    %1170 = vrot.lane.b32.xlu0 %v1126, 124
    %v1171 = vpop.permute.xlu0 %1170
    %1172 = vrot.lane.b32.xlu0 %v1127, 124
    %v1173 = vpop.permute.xlu0 %1172
    %1174 = vrot.lane.b32.xlu0 %v1128, 124
    %v1175 = vpop.permute.xlu0 %1174
    %1176 = vrot.lane.b32.xlu0 %v1129, 124
    %v1177 = vpop.permute.xlu0 %1176
    %vm1194 = vcmask 56321
    %v1195 = vsel %vm1194, %v1147, 0.0
    %1196 = vadd.xlane.f32.xlu0 %v1195
    %v1197 = vpop.xlane.xlu0 %1196
    %vm1198 = vcmask 55296
    %v1199 = vsel %vm1198, %v1149, 0.0
    %1200 = vadd.xlane.f32.xlu0 %v1199
    %v1201 = vpop.xlane.xlu0 %1200
    %v1202 = vsel %vm1194, %v1151, 0.0
    %1203 = vadd.xlane.f32.xlu0 %v1202
    %v1204 = vpop.xlane.xlu0 %1203
    %v1205 = vsel %vm1198, %v1153, 0.0
    %1206 = vadd.xlane.f32.xlu0 %v1205
    %v1207 = vpop.xlane.xlu0 %1206
    %v1208 = vsel %vm1194, %v1155, 0.0
    %1209 = vadd.xlane.f32.xlu0 %v1208
    %v1210 = vpop.xlane.xlu0 %1209
    %v1211 = vsel %vm1198, %v1157, 0.0
    %1212 = vadd.xlane.f32.xlu0 %v1211
    %v1213 = vpop.xlane.xlu0 %1212
    %v1214 = vsel %vm1194, %v1159, 0.0
    %1215 = vadd.xlane.f32.xlu0 %v1214
    %v1216 = vpop.xlane.xlu0 %1215
    %v1217 = vsel %vm1198, %v1161, 0.0
    %1218 = vadd.xlane.f32.xlu0 %v1217
    %v1219 = vpop.xlane.xlu0 %1218
    %v1220 = vsel %vm1194, %v1163, 0.0
    %1221 = vadd.xlane.f32.xlu0 %v1220
    %v1222 = vpop.xlane.xlu0 %1221
    %v1223 = vsel %vm1198, %v1165, 0.0
    %1224 = vadd.xlane.f32.xlu0 %v1223
    %v1225 = vpop.xlane.xlu0 %1224
    %v1226 = vsel %vm1194, %v1167, 0.0
    %1227 = vadd.xlane.f32.xlu0 %v1226
    %v1228 = vpop.xlane.xlu0 %1227
    %v1229 = vsel %vm1198, %v1169, 0.0
    %1230 = vadd.xlane.f32.xlu0 %v1229
    %v1231 = vpop.xlane.xlu0 %1230
    %v1232 = vsel %vm1194, %v1171, 0.0
    %1233 = vadd.xlane.f32.xlu0 %v1232
    %v1234 = vpop.xlane.xlu0 %1233
    %v1235 = vsel %vm1198, %v1173, 0.0
    %1236 = vadd.xlane.f32.xlu0 %v1235
    %v1237 = vpop.xlane.xlu0 %1236
    %v1238 = vsel %vm1194, %v1175, 0.0
    %1239 = vadd.xlane.f32.xlu0 %v1238
    %v1240 = vpop.xlane.xlu0 %1239
    %v1241 = vsel %vm1198, %v1177, 0.0
    %1242 = vadd.xlane.f32.xlu0 %v1241
    %v1243 = vpop.xlane.xlu0 %1242
    %v1244 = vadd.f32 %v987, %v1197
    %v1245 = vadd.f32 %v991, %v1201
    %v1246 = vadd.f32 %v994, %v1204
    %v1247 = vadd.f32 %v997, %v1207
    %v1248 = vadd.f32 %v1000, %v1210
    %v1249 = vadd.f32 %v1003, %v1213
    %v1250 = vadd.f32 %v1006, %v1216
    %v1251 = vadd.f32 %v1009, %v1219
    %v1252 = vadd.f32 %v1012, %v1222
    %v1253 = vadd.f32 %v1015, %v1225
    %v1254 = vadd.f32 %v1018, %v1228
    %v1255 = vadd.f32 %v1021, %v1231
    %v1256 = vadd.f32 %v1024, %v1234
    %v1257 = vadd.f32 %v1027, %v1237
    %v1258 = vadd.f32 %v1030, %v1240
    %v1259 = vadd.f32 %v1033, %v1243
    %1260 = vrot.lane.b32.xlu0 %v143, 4
    %v1261 = vpop.permute.xlu0 %1260
    %1262 = vrot.lane.b32.xlu0 %v144, 4
    %v1263 = vpop.permute.xlu0 %1262
    %1264 = vrot.lane.b32.xlu0 %v145, 4
    %v1265 = vpop.permute.xlu0 %1264
    %1266 = vrot.lane.b32.xlu0 %v146, 4
    %v1267 = vpop.permute.xlu0 %1266
    %1268 = vrot.lane.b32.xlu0 %v147, 4
    %v1269 = vpop.permute.xlu0 %1268
    %1270 = vrot.lane.b32.xlu0 %v148, 4
    %v1271 = vpop.permute.xlu0 %1270
    %1272 = vrot.lane.b32.xlu0 %v149, 4
    %v1273 = vpop.permute.xlu0 %1272
    %1274 = vrot.lane.b32.xlu0 %v150, 4
    %v1275 = vpop.permute.xlu0 %1274
    %1276 = vrot.lane.b32.xlu0 %v151, 4
    %v1277 = vpop.permute.xlu0 %1276
    %1278 = vrot.lane.b32.xlu0 %v152, 4
    %v1279 = vpop.permute.xlu0 %1278
    %1280 = vrot.lane.b32.xlu0 %v153, 4
    %v1281 = vpop.permute.xlu0 %1280
    %1282 = vrot.lane.b32.xlu0 %v154, 4
    %v1283 = vpop.permute.xlu0 %1282
    %1284 = vrot.lane.b32.xlu0 %v155, 4
    %v1285 = vpop.permute.xlu0 %1284
    %1286 = vrot.lane.b32.xlu0 %v156, 4
    %v1287 = vpop.permute.xlu0 %1286
    %1288 = vrot.lane.b32.xlu0 %v157, 4
    %v1289 = vpop.permute.xlu0 %1288
    %1290 = vrot.lane.b32.xlu0 %v158, 4
    %v1291 = vpop.permute.xlu0 %1290
    %v1308 = vsub.f32 %v728, %v1261
    %v1309 = vsub.f32 %v729, %v1263
    %v1310 = vsub.f32 %v730, %v1265
    %v1311 = vsub.f32 %v731, %v1267
    %v1312 = vsub.f32 %v732, %v1269
    %v1313 = vsub.f32 %v733, %v1271
    %v1314 = vsub.f32 %v734, %v1273
    %v1315 = vsub.f32 %v735, %v1275
    %v1316 = vsub.f32 %v736, %v1277
    %v1317 = vsub.f32 %v737, %v1279
    %v1318 = vsub.f32 %v738, %v1281
    %v1319 = vsub.f32 %v739, %v1283
    %v1320 = vsub.f32 %v740, %v1285
    %v1321 = vsub.f32 %v741, %v1287
    %v1322 = vsub.f32 %v742, %v1289
    %v1323 = vsub.f32 %v743, %v1291
    %v1324 = vmax.f32 %v1308, 0.0
    %v1325 = vmax.f32 %v1309, 0.0
    %v1326 = vmax.f32 %v1310, 0.0
    %v1327 = vmax.f32 %v1311, 0.0
    %v1328 = vmax.f32 %v1312, 0.0
    %v1329 = vmax.f32 %v1313, 0.0
    %v1330 = vmax.f32 %v1314, 0.0
    %v1331 = vmax.f32 %v1315, 0.0
    %v1332 = vmax.f32 %v1316, 0.0
    %v1333 = vmax.f32 %v1317, 0.0
    %v1334 = vmax.f32 %v1318, 0.0
    %v1335 = vmax.f32 %v1319, 0.0
    %v1336 = vmax.f32 %v1320, 0.0
    %v1337 = vmax.f32 %v1321, 0.0
    %v1338 = vmax.f32 %v1322, 0.0
    %v1339 = vmax.f32 %v1323, 0.0
    %1356 = vrot.lane.b32.xlu0 %v1324, 117
    %v1357 = vpop.permute.xlu0 %1356
    %1358 = vrot.lane.b32.xlu0 %v1325, 117
    %v1359 = vpop.permute.xlu0 %1358
    %1360 = vrot.lane.b32.xlu0 %v1326, 117
    %v1361 = vpop.permute.xlu0 %1360
    %1362 = vrot.lane.b32.xlu0 %v1327, 117
    %v1363 = vpop.permute.xlu0 %1362
    %1364 = vrot.lane.b32.xlu0 %v1328, 117
    %v1365 = vpop.permute.xlu0 %1364
    %1366 = vrot.lane.b32.xlu0 %v1329, 117
    %v1367 = vpop.permute.xlu0 %1366
    %1368 = vrot.lane.b32.xlu0 %v1330, 117
    %v1369 = vpop.permute.xlu0 %1368
    %1370 = vrot.lane.b32.xlu0 %v1331, 117
    %v1371 = vpop.permute.xlu0 %1370
    %1372 = vrot.lane.b32.xlu0 %v1332, 117
    %v1373 = vpop.permute.xlu0 %1372
    %1374 = vrot.lane.b32.xlu0 %v1333, 117
    %v1375 = vpop.permute.xlu0 %1374
    %1376 = vrot.lane.b32.xlu0 %v1334, 117
    %v1377 = vpop.permute.xlu0 %1376
    %1378 = vrot.lane.b32.xlu0 %v1335, 117
    %v1379 = vpop.permute.xlu0 %1378
    %1380 = vrot.lane.b32.xlu0 %v1336, 117
    %v1381 = vpop.permute.xlu0 %1380
    %1382 = vrot.lane.b32.xlu0 %v1337, 117
    %v1383 = vpop.permute.xlu0 %1382
    %1384 = vrot.lane.b32.xlu0 %v1338, 117
    %v1385 = vpop.permute.xlu0 %1384
    %1386 = vrot.lane.b32.xlu0 %v1339, 117
    %v1387 = vpop.permute.xlu0 %1386
    %v1404 = vsel %vm984, %v1357, 0.0
    %1405 = vadd.xlane.f32.xlu0 %v1404
    %v1406 = vpop.xlane.xlu0 %1405
    %v1407 = vsel %vm988, %v1359, 0.0
    %1408 = vadd.xlane.f32.xlu0 %v1407
    %v1409 = vpop.xlane.xlu0 %1408
    %v1410 = vsel %vm984, %v1361, 0.0
    %1411 = vadd.xlane.f32.xlu0 %v1410
    %v1412 = vpop.xlane.xlu0 %1411
    %v1413 = vsel %vm988, %v1363, 0.0
    %1414 = vadd.xlane.f32.xlu0 %v1413
    %v1415 = vpop.xlane.xlu0 %1414
    %v1416 = vsel %vm984, %v1365, 0.0
    %1417 = vadd.xlane.f32.xlu0 %v1416
    %v1418 = vpop.xlane.xlu0 %1417
    %v1419 = vsel %vm988, %v1367, 0.0
    %1420 = vadd.xlane.f32.xlu0 %v1419
    %v1421 = vpop.xlane.xlu0 %1420
    %v1422 = vsel %vm984, %v1369, 0.0
    %1423 = vadd.xlane.f32.xlu0 %v1422
    %v1424 = vpop.xlane.xlu0 %1423
    %v1425 = vsel %vm988, %v1371, 0.0
    %1426 = vadd.xlane.f32.xlu0 %v1425
    %v1427 = vpop.xlane.xlu0 %1426
    %v1428 = vsel %vm984, %v1373, 0.0
    %1429 = vadd.xlane.f32.xlu0 %v1428
    %v1430 = vpop.xlane.xlu0 %1429
    %v1431 = vsel %vm988, %v1375, 0.0
    %1432 = vadd.xlane.f32.xlu0 %v1431
    %v1433 = vpop.xlane.xlu0 %1432
    %v1434 = vsel %vm984, %v1377, 0.0
    %1435 = vadd.xlane.f32.xlu0 %v1434
    %v1436 = vpop.xlane.xlu0 %1435
    %v1437 = vsel %vm988, %v1379, 0.0
    %1438 = vadd.xlane.f32.xlu0 %v1437
    %v1439 = vpop.xlane.xlu0 %1438
    %v1440 = vsel %vm984, %v1381, 0.0
    %1441 = vadd.xlane.f32.xlu0 %v1440
    %v1442 = vpop.xlane.xlu0 %1441
    %v1443 = vsel %vm988, %v1383, 0.0
    %1444 = vadd.xlane.f32.xlu0 %v1443
    %v1445 = vpop.xlane.xlu0 %1444
    %v1446 = vsel %vm984, %v1385, 0.0
    %1447 = vadd.xlane.f32.xlu0 %v1446
    %v1448 = vpop.xlane.xlu0 %1447
    %v1449 = vsel %vm988, %v1387, 0.0
    %1450 = vadd.xlane.f32.xlu0 %v1449
    %v1451 = vpop.xlane.xlu0 %1450
    %v1452 = vadd.f32 %v1244, %v1406
    %v1453 = vadd.f32 %v1245, %v1409
    %v1454 = vadd.f32 %v1246, %v1412
    %v1455 = vadd.f32 %v1247, %v1415
    %v1456 = vadd.f32 %v1248, %v1418
    %v1457 = vadd.f32 %v1249, %v1421
    %v1458 = vadd.f32 %v1250, %v1424
    %v1459 = vadd.f32 %v1251, %v1427
    %v1460 = vadd.f32 %v1252, %v1430
    %v1461 = vadd.f32 %v1253, %v1433
    %v1462 = vadd.f32 %v1254, %v1436
    %v1463 = vadd.f32 %v1255, %v1439
    %v1464 = vadd.f32 %v1256, %v1442
    %v1465 = vadd.f32 %v1257, %v1445
    %v1466 = vadd.f32 %v1258, %v1448
    %v1467 = vadd.f32 %v1259, %v1451
    %v1484 = vlaneseq
    %v1485 = vand.u32 %v1484, 127
    %v1486 = vadd.s32 %v1485, 1
    %v1487 = vlaneseq
    %v1488 = vshrl.u32 %v1487, 7
    %v1489 = vsub.s32 %v1486, %v1488
    %v1490 = vrot.slane %v1452, %v1489
    %v1491 = vadd.s32 %v1485, 4294967289
    %v1492 = vlaneseq
    %v1493 = vshrl.u32 %v1492, 7
    %v1494 = vsub.s32 %v1491, %v1493
    %v1495 = vrot.slane %v1453, %v1494
    %vm1496 = vcmask 121912
    %v1497 = vsel %vm1496, %v1495, %v1490
    %v1498 = vlaneseq
    %v1499 = vshrl.u32 %v1498, 7
    %v1500 = vsub.s32 %v1486, %v1499
    %v1501 = vrot.slane %v1454, %v1500
    %v1502 = vlaneseq
    %v1503 = vshrl.u32 %v1502, 7
    %v1504 = vsub.s32 %v1491, %v1503
    %v1505 = vrot.slane %v1455, %v1504
    %v1506 = vsel %vm1496, %v1505, %v1501
    %v1507 = vlaneseq
    %v1508 = vshrl.u32 %v1507, 7
    %v1509 = vsub.s32 %v1486, %v1508
    %v1510 = vrot.slane %v1456, %v1509
    %v1511 = vlaneseq
    %v1512 = vshrl.u32 %v1511, 7
    %v1513 = vsub.s32 %v1491, %v1512
    %v1514 = vrot.slane %v1457, %v1513
    %v1515 = vsel %vm1496, %v1514, %v1510
    %v1516 = vlaneseq
    %v1517 = vshrl.u32 %v1516, 7
    %v1518 = vsub.s32 %v1486, %v1517
    %v1519 = vrot.slane %v1458, %v1518
    %v1520 = vlaneseq
    %v1521 = vshrl.u32 %v1520, 7
    %v1522 = vsub.s32 %v1491, %v1521
    %v1523 = vrot.slane %v1459, %v1522
    %v1524 = vsel %vm1496, %v1523, %v1519
    %v1525 = vlaneseq
    %v1526 = vshrl.u32 %v1525, 7
    %v1527 = vsub.s32 %v1486, %v1526
    %v1528 = vrot.slane %v1460, %v1527
    %v1529 = vlaneseq
    %v1530 = vshrl.u32 %v1529, 7
    %v1531 = vsub.s32 %v1491, %v1530
    %v1532 = vrot.slane %v1461, %v1531
    %v1533 = vsel %vm1496, %v1532, %v1528
    %v1534 = vlaneseq
    %v1535 = vshrl.u32 %v1534, 7
    %v1536 = vsub.s32 %v1486, %v1535
    %v1537 = vrot.slane %v1462, %v1536
    %v1538 = vlaneseq
    %v1539 = vshrl.u32 %v1538, 7
    %v1540 = vsub.s32 %v1491, %v1539
    %v1541 = vrot.slane %v1463, %v1540
    %v1542 = vsel %vm1496, %v1541, %v1537
    %v1543 = vlaneseq
    %v1544 = vshrl.u32 %v1543, 7
    %v1545 = vsub.s32 %v1486, %v1544
    %v1546 = vrot.slane %v1464, %v1545
    %v1547 = vlaneseq
    %v1548 = vshrl.u32 %v1547, 7
    %v1549 = vsub.s32 %v1491, %v1548
    %v1550 = vrot.slane %v1465, %v1549
    %v1551 = vsel %vm1496, %v1550, %v1546
    %v1552 = vlaneseq
    %v1553 = vshrl.u32 %v1552, 7
    %v1554 = vsub.s32 %v1486, %v1553
    %v1555 = vrot.slane %v1466, %v1554
    %v1556 = vlaneseq
    %v1557 = vshrl.u32 %v1556, 7
    %v1558 = vsub.s32 %v1491, %v1557
    %v1559 = vrot.slane %v1467, %v1558
    %v1560 = vsel %vm1496, %v1559, %v1555
    %v1561 = vsel %vm643, %v1506, %v1497
    %v1562 = vsel %vm645, %v1515, %v1561
    %v1563 = vsel %vm647, %v1524, %v1562
    %v1564 = vsel %vm649, %v1533, %v1563
    %v1565 = vsel %vm651, %v1542, %v1564
    %v1566 = vsel %vm653, %v1551, %v1565
    %v1567 = vsel %vm655, %v1560, %v1566
    %v1569 = vsel %vm660, %v1567, 0.0
    %1570 = vadd.xlane.f32.xlu0 %v1569
    %v1571 = vpop.xlane.xlu0 %1570
    %v1572 = vmax.f32 %v663, %v1571
    %vm1573 = vcmask 7168
    %1574 = vst.msk [vmem:[%s1] sm:$0xff] %vm1573, %v1572
    // Predicated region
    $region10: #{bm_forward.1} parent=1 // pred_check
      _
    $region11: #{bm_forward.1} parent=1 // pred_check_branch
      %1576 = sbr.rel (0) target = $region13
    $region12: #{bm_forward.1} parent=1 // pred_region
      _
    $region13: #{bm_forward.1} parent=1 // pred_fallthru
      _
    // Predicated region
    $region14: #{bm_forward.1} parent=1 // pred_check
      _
    $region15: #{bm_forward.1} parent=1 // pred_check_branch
      %1578 = sbr.rel (0) target = $region17
    $region16: #{bm_forward.1} parent=1 // pred_region
      _
    $region17: #{bm_forward.1} parent=1 // pred_fallthru
      _
    %1579 = vsyncpa [#allocation3], 1

</llo_original>
